<compile_context>
chip_gen: v6e
topology: v6e:2x2x1
jax: 0.10.0
libtpu: 0.0.40
codegen_flags: <defaults>
</compile_context>

<pallas_src>
import jax
import jax.numpy as jnp
from jax import lax
from jax.experimental import pallas as pl
from jax.experimental.pallas import tpu as pltpu

# ---------------- problem config (small, deterministic) ----------------
B, N, H, OUT = 16, 32, 32, 1      # batch, input features, hidden, f-output (OUT must be 1)
EPS = 0.01
D = 1.0                           # ReHU d  ->  a = 1/d, b = -d/2
REHU_A = 1.0 / D
REHU_B = -D / 2.0
HALF_A = 0.5 * REHU_A


def _pick_tile(bx: int) -> int:
    """Batch tile (always a multiple of 8).

    * bx rounded up to a multiple of 8 and <= 256  -> a single grid step (fixed per-step
      pipeline overhead dominates the tiny per-row work, so don't split).
    * larger batches -> tb is a multiple of 128 (so (1, tb) output blocks are lane-aligned
      unmasked vst's) with >= 2 grid steps so the 'parallel' axis can be sharded across
      v7x's two TensorCores.  Capped at 2048; VMEM use is tens-of-KiB scale everywhere
      (non-issue even on v7x's 64 MiB), the cap only bounds per-step latency.
    """
    rounded = -(-bx // 8) * 8
    if rounded <= 256:
        return rounded
    tb = min(2048, (rounded // 2 // 128) * 128)
    return max(tb, 128)


# ---------------- Pallas kernel ----------------
def makepsd_kernel(x_ref, w1_ref, b1_ref, w2_ref, c_ref, o_ref):
    x = x_ref[...]                                               # (TB, N) f32

    # f(x) hidden layer on the MXU (contraction dim N).
    h = jnp.dot(x, w1_ref[...], preferred_element_type=jnp.float32) + b1_ref[...]
    h = jnp.maximum(h, 0.0)                                      # ReLU       (TB, H)

    # H -> 1 projection, born lane-dense: (1, H) . (TB, H)^T -> (1, TB) on the MXU.
    y_row = lax.dot_general(
        w2_ref[...], h,
        dimension_numbers=(((1,), (1,)), ((), ())),
        preferred_element_type=jnp.float32)                      # (1, TB)

    # s = f(x) - zero, with  c = b2 - zero  folded into a single SMEM scalar.
    s = y_row + c_ref[0, 0]

    # ReHU(s) = max(clamp(sign(s)*a/2*s^2, 0, -b), s + b) == max(min(a/2*relu(s)^2, -b), s + b)
    sp = jnp.maximum(s, 0.0)
    rehu = jnp.maximum(jnp.minimum(HALF_A * sp * sp, -REHU_B), s + REHU_B)   # (1, TB)

    # eps * sum(x**2, axis=1) as another lane-dense (1, TB) row: eps_row . (TB, N)^T on the MXU.
    xsq = x * x
    eps_row = jnp.full((1, x.shape[1]), EPS, dtype=jnp.float32)
    quad_row = lax.dot_general(
        eps_row, xsq,
        dimension_numbers=(((1,), (1,)), ((), ())),
        preferred_element_type=jnp.float32)                      # (1, TB)

    o_ref[...] = (rehu + quad_row).astype(o_ref.dtype)


def make_psd_pallas(x, w1, b1, w2, b2, zero):
    bx, n = x.shape
    h_dim = w1.shape[1]

    tb = _pick_tile(bx)
    bp = pl.cdiv(bx, tb) * tb                                    # padded batch (multiple of tb)
    if bp != bx:
        # Zero-pad the trailing rows instead of dropping them / producing a fragile tile size.
        x_in = jnp.zeros((bp, n), x.dtype).at[:bx].set(x)
    else:
        x_in = x
    grid = (bp // tb,)

    w2_row = w2.reshape(1, h_dim).astype(jnp.float32)            # (H, 1) -> (1, H) row operand
    c = (b2 - zero).reshape(1, 1).astype(jnp.float32)            # fold b2 and zero into one scalar

    cost = pl.CostEstimate(
        flops=2 * bp * n * h_dim + 2 * bp * h_dim + 2 * bp * n,
        transcendentals=0,
        bytes_accessed=4 * (bp * n + n * h_dim + 2 * h_dim + bp + 1),
    )

    out_row = pl.pallas_call(
        makepsd_kernel,
        out_shape=jax.ShapeDtypeStruct((1, bp), jnp.float32),    # lane-dense output slab
        grid_spec=pltpu.PrefetchScalarGridSpec(
            num_scalar_prefetch=0,
            grid=grid,
            in_specs=[
                pl.BlockSpec((tb, n), lambda i: (i, 0)),                 # x tile (streaming)
                pl.BlockSpec((n, h_dim), lambda i: (0, 0)),              # W1 (stays resident)
                pl.BlockSpec((1, h_dim), lambda i: (0, 0)),              # b1
                pl.BlockSpec((1, h_dim), lambda i: (0, 0)),              # w2 as a row
                pl.BlockSpec(memory_space=pltpu.MemorySpace.SMEM),       # c = b2 - zero (scalar)
            ],
            out_specs=pl.BlockSpec((1, tb), lambda i: (0, i)),
        ),
        compiler_params=pltpu.CompilerParams(
            dimension_semantics=("parallel",),
        ),
        cost_estimate=cost,
    )(x_in, w1, b1, w2_row, c)

    # (1, bp) row -> (bp, 1) column (pure reshape, same element order), then drop padding.
    return out_row.reshape(bp, OUT)[:bx]


# ---------------- plain-JAX reference (for correctness check) ----------------
def f_ref(x, w1, b1, w2, b2):
    h = jnp.maximum(x @ w1 + b1, 0.0)
    return h @ w2 + b2


def rehu_ref(s):
    # Original PyTorch formulation (sign-based), to validate the simplified kernel form.
    quad = jnp.sign(s) * (REHU_A / 2.0) * s * s
    return jnp.maximum(jnp.clip(quad, 0.0, -REHU_B), s + REHU_B)


def make_psd_ref(x, w1, b1, w2, b2, zero):
    s = f_ref(x, w1, b1, w2, b2) - zero
    return rehu_ref(s) + EPS * jnp.sum(x * x, axis=1, keepdims=True)


# ---------------- main ----------------
if __name__ == "__main__":
    key = jax.random.PRNGKey(0)
    kx, k1, k2, k3, k4 = jax.random.split(key, 5)

    # deterministic "parameter" init (synthetic; shapes follow the module)
    w1 = jax.random.normal(k1, (N, H), jnp.float32) * (1.0 / jnp.sqrt(N))
    b1 = jax.random.normal(k2, (1, H), jnp.float32) * 0.1
    w2 = jax.random.normal(k3, (H, OUT), jnp.float32) * (1.0 / jnp.sqrt(H))
    b2 = jax.random.normal(k4, (1, OUT), jnp.float32) * 0.1

    # zero = f(zeros(1, N))  -- parameter setup (mirrors nn.Module.__init__)
    zero = f_ref(jnp.zeros((1, N), jnp.float32), w1, b1, w2, b2)

    x = jax.random.normal(kx, (B, N), jnp.float32)

    out = make_psd_pallas(x, w1, b1, w2, b2, zero)
    out = jax.block_until_ready(out)

    ref = make_psd_ref(x, w1, b1, w2, b2, zero)
    assert out.shape == (B, OUT)
    assert jnp.allclose(out, ref, atol=1e-5, rtol=1e-5), "mismatch vs reference"

    print("KERNEL_OK")
</pallas_src>

<mosaic_0001>
module attributes {stable_mosaic.version = 11 : i64} {
  func.func @makepsd_kernel(%arg0: i32, %arg1: memref<16x32xf32, #tpu.memory_space<vmem>>, %arg2: memref<32x32xf32, #tpu.memory_space<vmem>>, %arg3: memref<1x32xf32, #tpu.memory_space<vmem>>, %arg4: memref<1x32xf32, #tpu.memory_space<vmem>>, %arg5: memref<1x1xf32, #tpu.memory_space<smem>>, %arg6: memref<1x16xf32, #tpu.memory_space<vmem>>) attributes {dimension_semantics = [#tpu.dimension_semantics<parallel>], iteration_bounds = array<i64: 1>, scalar_prefetch = 0 : i64, scratch_operands = 0 : i64, tpu.core_type = #tpu.core_type<tc>, window_params = [{transform_indices = @transform_0, window_bounds = array<i64: 16, 32>}, {pipeline_mode = #tpu.pipeline_mode<synchronous>, transform_indices = @transform_1, window_bounds = array<i64: 32, 32>}, {pipeline_mode = #tpu.pipeline_mode<synchronous>, transform_indices = @transform_2, window_bounds = array<i64: 1, 32>}, {pipeline_mode = #tpu.pipeline_mode<synchronous>, transform_indices = @transform_3, window_bounds = array<i64: 1, 32>}, {transform_indices = @transform_4, window_bounds = array<i64: 1, 1>}, {transform_indices = @transform_5, window_bounds = array<i64: 1, 16>}]} {
    %c0 = arith.constant 0 : index
    %c0_0 = arith.constant 0 : index
    %0 = vector.load %arg1[%c0, %c0_0] : memref<16x32xf32, #tpu.memory_space<vmem>>, vector<16x32xf32>
    %c0_1 = arith.constant 0 : index
    %c0_2 = arith.constant 0 : index
    %1 = vector.load %arg2[%c0_1, %c0_2] : memref<32x32xf32, #tpu.memory_space<vmem>>, vector<32x32xf32>
    %cst = arith.constant dense<0.000000e+00> : vector<16x32xf32>
    %2 = tpu.matmul %0, %1, %cst {dimension_numbers = #tpu.dot_dimension_numbers<[1], [0], [0], [1], [0, 0, 1, 1], [], []>} : vector<16x32xf32>, vector<32x32xf32>, vector<16x32xf32> -> vector<16x32xf32>
    %c0_3 = arith.constant 0 : index
    %c0_4 = arith.constant 0 : index
    %3 = vector.load %arg3[%c0_3, %c0_4] : memref<1x32xf32, #tpu.memory_space<vmem>>, vector<1x32xf32>
    %4 = vector.broadcast %3 : vector<1x32xf32> to vector<16x32xf32>
    %5 = arith.addf %2, %4 : vector<16x32xf32>
    %cst_5 = arith.constant 0.000000e+00 : f32
    %6 = vector.broadcast %cst_5 : f32 to vector<16x32xf32>
    %7 = arith.maximumf %5, %6 : vector<16x32xf32>
    %c0_6 = arith.constant 0 : index
    %c0_7 = arith.constant 0 : index
    %8 = vector.load %arg4[%c0_6, %c0_7] : memref<1x32xf32, #tpu.memory_space<vmem>>, vector<1x32xf32>
    %cst_8 = arith.constant dense<0.000000e+00> : vector<1x16xf32>
    %9 = tpu.matmul %8, %7, %cst_8 {dimension_numbers = #tpu.dot_dimension_numbers<[1], [1], [0], [0], [0, 0, 1, 0], [], []>} : vector<1x32xf32>, vector<16x32xf32>, vector<1x16xf32> -> vector<1x16xf32>
    %c0_9 = arith.constant 0 : index
    %c0_10 = arith.constant 0 : index
    %10 = memref.load %arg5[%c0_9, %c0_10] : memref<1x1xf32, #tpu.memory_space<smem>>
    %11 = vector.broadcast %10 : f32 to vector<1x16xf32>
    %12 = arith.addf %9, %11 : vector<1x16xf32>
    %cst_11 = arith.constant 0.000000e+00 : f32
    %13 = vector.broadcast %cst_11 : f32 to vector<1x16xf32>
    %14 = arith.maximumf %12, %13 : vector<1x16xf32>
    %cst_12 = arith.constant 5.000000e-01 : f32
    %15 = vector.broadcast %cst_12 : f32 to vector<1x16xf32>
    %16 = arith.mulf %15, %14 : vector<1x16xf32>
    %17 = arith.mulf %16, %14 : vector<1x16xf32>
    %cst_13 = arith.constant 5.000000e-01 : f32
    %18 = vector.broadcast %cst_13 : f32 to vector<1x16xf32>
    %19 = arith.minimumf %17, %18 : vector<1x16xf32>
    %cst_14 = arith.constant -5.000000e-01 : f32
    %20 = vector.broadcast %cst_14 : f32 to vector<1x16xf32>
    %21 = arith.addf %12, %20 : vector<1x16xf32>
    %22 = arith.maximumf %19, %21 : vector<1x16xf32>
    %23 = arith.mulf %0, %0 : vector<16x32xf32>
    %cst_15 = arith.constant 0.00999999977 : f32
    %24 = vector.broadcast %cst_15 : f32 to vector<1x32xf32>
    %cst_16 = arith.constant dense<0.000000e+00> : vector<1x16xf32>
    %25 = tpu.matmul %24, %23, %cst_16 {dimension_numbers = #tpu.dot_dimension_numbers<[1], [1], [0], [0], [0, 0, 1, 0], [], []>} : vector<1x32xf32>, vector<16x32xf32>, vector<1x16xf32> -> vector<1x16xf32>
    %26 = arith.addf %22, %25 : vector<1x16xf32>
    %c0_17 = arith.constant 0 : index
    %c0_18 = arith.constant 0 : index
    %27 = vector.load %arg6[%c0_17, %c0_18] : memref<1x16xf32, #tpu.memory_space<vmem>>, vector<1x16xf32>
    tpu.vector_store %arg6[%c0_17, %c0_18], %26 {strides = array<i32>} : memref<1x16xf32, #tpu.memory_space<vmem>>, vector<1x16xf32>,
    return
  }
  func.func @transform_0(%arg0: i32) -> (i32, i32) {
    %c0_i32 = arith.constant 0 : i32
    %c0_i32_0 = arith.constant 0 : i32
    return %arg0, %c0_i32 : i32, i32
  }
  func.func @transform_1(%arg0: i32) -> (i32, i32) {
    %c0_i32 = arith.constant 0 : i32
    %c0_i32_0 = arith.constant 0 : i32
    %c0_i32_1 = arith.constant 0 : i32
    return %c0_i32, %c0_i32_0 : i32, i32
  }
  func.func @transform_2(%arg0: i32) -> (i32, i32) {
    %c0_i32 = arith.constant 0 : i32
    %c0_i32_0 = arith.constant 0 : i32
    %c0_i32_1 = arith.constant 0 : i32
    return %c0_i32, %c0_i32_0 : i32, i32
  }
  func.func @transform_3(%arg0: i32) -> (i32, i32) {
    %c0_i32 = arith.constant 0 : i32
    %c0_i32_0 = arith.constant 0 : i32
    %c0_i32_1 = arith.constant 0 : i32
    return %c0_i32, %c0_i32_0 : i32, i32
  }
  func.func @transform_4(%arg0: i32) -> (i32, i32) {
    %c0_i32 = arith.constant 0 : i32
    %c0_i32_0 = arith.constant 0 : i32
    %c0_i32_1 = arith.constant 0 : i32
    return %c0_i32, %c0_i32_0 : i32, i32
  }
  func.func @transform_5(%arg0: i32) -> (i32, i32) {
    %c0_i32 = arith.constant 0 : i32
    %c0_i32_0 = arith.constant 0 : i32
    return %c0_i32, %arg0 : i32, i32
  }
}

</mosaic_0001>

<llo_original>
// kernel: tpu_custom_call.1
$region0: #{tpu_custom_call.1}
  #allocation0 [shape = 'u32[]', space=smem, size = 0x4, offset = 0x4, fixed_abs, tag = 'smem constant byte address 0x4 - core index']
  #allocation1 [shape = 'u32[144,128]{1,0:T(1,128)}', space=vmem, size = 0x12000, scoped, tag = 'internal scratch']
  #allocation2 [shape = 'f32[1,1]{1,0:T(1,128)S(6)}', space=smem, size = 0x200, scoped, tag = 'scoped memory for tpu_custom_call.1']
  %s0 = inlined_call_operand.hbm [shape: f32[16,32], index: 0, kind: input, shape index: {}]
  %s1 = inlined_call_operand.hbm [shape: f32[32,32], index: 1, kind: input, shape index: {}]
  %s2 = inlined_call_operand.vmem [shape: f32[1,32], index: 2, kind: input, shape index: {}]
  %s3 = inlined_call_operand.vmem [shape: f32[1,32], index: 3, kind: input, shape index: {}]
  %s4 = inlined_call_operand.<no memory space> [shape: f32[1,1], index: 4, kind: input, shape index: {}]
  %s5 = inlined_call_operand.hbm [shape: f32[1,16], index: 5, kind: output, shape index: {}]
  %s6 = sld [smem:[#allocation0]]
  $region38: #{tpu_custom_call.1} parent=0
    _
  %s8 = ssub.s32 1, %s6
  %s9 = scalar_select 0, %s8, %s6
  %10 = sst [smem:[#allocation2]] %s4
  $region1: #{tpu_custom_call.1} parent=0
    #allocation3 [shape = 'u8[8192]{0}', space=vmem, size = 0x2000, scoped, tag = 'input window, operand 0, single buffered']
    #allocation4 [shape = 's32[1]{0}', space=sflag, size = 0x4, scoped, tag = 'scoped memory for tpu_custom_call.1']
    #allocation5 [shape = 's32[1]{0}', space=sflag, size = 0x4, scoped, tag = 'scoped memory for tpu_custom_call.1']
    #allocation6 [shape = 'u8[16384]{0}', space=vmem, size = 0x4000, scoped, tag = 'input window, operand 1, single buffered']
    #allocation7 [shape = 's32[1]{0}', space=sflag, size = 0x4, scoped, tag = 'scoped memory for tpu_custom_call.1']
    #allocation8 [shape = 'u8[512]{0}', space=vmem, size = 0x400, scoped, tag = 'output window, operand 0, single buffered']
    %11 = vsyncpa [#allocation4], 0
    %12 = vsyncpa [#allocation7], 0
    %13 = vsyncpa [#allocation5], 0
    // Predicated region
    $region2: #{tpu_custom_call.1} parent=1 // pred_check
      _
    $region3: #{tpu_custom_call.1} parent=1 // pred_check_branch
      %15 = sbr.rel (0) target = $region5
    $region4: #{tpu_custom_call.1} parent=1 // pred_region
      %s17 = ssub.s32 256, 256
      %18 = vsyncadd [#allocation4], %s17
      %s19 = sshll.u32 [#allocation3], 4
      %s20 = int_to_ptr.vmem [resolvable:$true] %s19
      %25 = dma.hbm_to_vmem [thread:$0]  %s0, 256, %s20, [#allocation4], 128, 128, 8
    $region5: #{tpu_custom_call.1} parent=1 // pred_fallthru
      _
    // Predicated region
    $region6: #{tpu_custom_call.1} parent=1 // pred_check
      _
    $region7: #{tpu_custom_call.1} parent=1 // pred_check_branch
      %27 = sbr.rel (0) target = $region9
    $region8: #{tpu_custom_call.1} parent=1 // pred_region
      %s29 = ssub.s32 512, 512
      %30 = vsyncadd [#allocation7], %s29
      %s31 = sshll.u32 [#allocation6], 4
      %s32 = int_to_ptr.vmem [resolvable:$true] %s31
      %37 = dma.hbm_to_vmem [thread:$0]  %s1, 512, %s32, [#allocation7], 128, 128, 8
    $region9: #{tpu_custom_call.1} parent=1 // pred_fallthru
      _
    // Predicated region
    $region10: #{tpu_custom_call.1} parent=1 // pred_check
      _
    $region11: #{tpu_custom_call.1} parent=1 // pred_check_branch
      %39 = sbr.rel (0) target = $region13
    $region12: #{tpu_custom_call.1} parent=1 // pred_region
      _
    $region13: #{tpu_custom_call.1} parent=1 // pred_fallthru
      _
    // Predicated region
    $region14: #{tpu_custom_call.1} parent=1 // pred_check
      _
    $region15: #{tpu_custom_call.1} parent=1 // pred_check_branch
      %41 = sbr.rel (0) target = $region17
    $region16: #{tpu_custom_call.1} parent=1 // pred_region
      _
    $region17: #{tpu_custom_call.1} parent=1 // pred_fallthru
      _
    // Predicated region
    $region18: #{tpu_custom_call.1} parent=1 // pred_check
      _
    $region19: #{tpu_custom_call.1} parent=1 // pred_check_branch
      %43 = sbr.rel (0) target = $region21
    $region20: #{tpu_custom_call.1} parent=1 // pred_region
      _
    $region21: #{tpu_custom_call.1} parent=1 // pred_fallthru
      _
    // Predicated region
    $region22: #{tpu_custom_call.1} parent=1 // pred_check
      _
    $region23: #{tpu_custom_call.1} parent=1 // pred_check_branch
      %45 = sbr.rel (0) target = $region25
    $region24: #{tpu_custom_call.1} parent=1 // pred_region
      %46 = dma.done [#allocation4], 256
    $region25: #{tpu_custom_call.1} parent=1 // pred_fallthru
      _
    // Predicated region
    $region26: #{tpu_custom_call.1} parent=1 // pred_check
      _
    $region27: #{tpu_custom_call.1} parent=1 // pred_check_branch
      %48 = sbr.rel (0) target = $region29
    $region28: #{tpu_custom_call.1} parent=1 // pred_region
      %49 = dma.done [#allocation7], 512
    $region29: #{tpu_custom_call.1} parent=1 // pred_fallthru
      _
    %v50 = vld [vmem:[#allocation3] sm:$0xff]
    %v51 = vld [vmem:[#allocation3 + $0x8] sm:$0xff]
    %v52 = vld [vmem:[#allocation6] sm:$0xff]
    %v53 = vld [vmem:[#allocation6 + $0x8] sm:$0xff]
    %v54 = vld [vmem:[#allocation6 + $0x10] sm:$0xff]
    %v55 = vld [vmem:[#allocation6 + $0x18] sm:$0xff]
    %v56 = vld [vmem:[%s2] sm:$0x1]
    %v58 = vlaneseq
    %v59 = vshrl.u32 %v58, 7
    %v60 = vsub.s32 0, %v59
    %v61 = vrot.slane %v56, %v60
    %vm63 = vcmask 261120
    %v65 = vsel %vm63, %v50, 0
    %v68 = vsel %vm63, %v51, 0
    %70 = vmatprep.subr.mxu0 0.0
    %71 = vmatpush1.msra.mxu0 0.0
    %72 = vmatprep.subr.mxu0 0.0
    %73 = vmatpush1.msra.mxu0 0.0
    %74 = vmatprep.subr.mxu0 0.0
    %75 = vmatpush1.msra.mxu0 0.0
    %76 = vmatprep.subr.mxu0 0.0
    %77 = vmatpush1.msra.mxu0 0.0
    %78 = vmatprep.subr.mxu0 0.0
    %79 = vmatpush1.msra.mxu0 0.0
    %80 = vmatprep.subr.mxu0 0.0
    %81 = vmatpush1.msra.mxu0 0.0
    %82 = vmatprep.subr.mxu0 0.0
    %83 = vmatpush1.msra.mxu0 0.0
    %84 = vmatprep.subr.mxu0 0.0
    %85 = vmatpush1.msra.mxu0 0.0
    %86 = vmatprep.subr.mxu0 0.0
    %87 = vmatpush1.msra.mxu0 0.0
    %88 = vmatprep.subr.mxu0 0.0
    %89 = vmatpush1.msra.mxu0 0.0
    %90 = vmatprep.subr.mxu0 0.0
    %91 = vmatpush1.msra.mxu0 0.0
    %92 = vmatprep.subr.mxu0 0.0
    %93 = vmatpush1.msra.mxu0 0.0
    %94 = vmatprep.subr.mxu0 0.0
    %95 = vmatpush1.msra.mxu0 %v55
    %96 = vmatprep.subr.mxu0 0.0
    %97 = vmatpush1.msra.mxu0 %v54
    %98 = vmatprep.subr.mxu0 0.0
    %99 = vmatpush1.msra.mxu0 %v53
    %100 = vmatprep.subr.mxu0 0.0
    %101 = vmatpush1.msra.mxu0 %v52
    %102 = vmatprep.subr.mxu0 0.0
    %103 = vmatpush2.msra.mxu0 0.0
    %104 = vmatprep.subr.mxu0 0.0
    %105 = vmatpush2.msra.mxu0 0.0
    %106 = vmatprep.subr.mxu0 0.0
    %107 = vmatpush2.msra.mxu0 0.0
    %108 = vmatprep.subr.mxu0 0.0
    %109 = vmatpush2.msra.mxu0 0.0
    %110 = vmatprep.subr.mxu0 0.0
    %111 = vmatpush2.msra.mxu0 0.0
    %112 = vmatprep.subr.mxu0 0.0
    %113 = vmatpush2.msra.mxu0 0.0
    %114 = vmatprep.subr.mxu0 0.0
    %115 = vmatpush2.msra.mxu0 0.0
    %116 = vmatprep.subr.mxu0 0.0
    %117 = vmatpush2.msra.mxu0 0.0
    %118 = vmatprep.subr.mxu0 0.0
    %119 = vmatpush2.msra.mxu0 0.0
    %120 = vmatprep.subr.mxu0 0.0
    %121 = vmatpush2.msra.mxu0 0.0
    %122 = vmatprep.subr.mxu0 0.0
    %123 = vmatpush2.msra.mxu0 0.0
    %124 = vmatprep.subr.mxu0 0.0
    %125 = vmatpush2.msra.mxu0 0.0
    %126 = vmatprep.subr.mxu0 0.0
    %127 = vmatpush2.msra.mxu0 0.0
    %128 = vmatprep.subr.mxu0 0.0
    %129 = vmatpush2.msra.mxu0 0.0
    %130 = vmatprep.subr.mxu0 0.0
    %131 = vmatpush2.msra.mxu0 0.0
    %132 = vmatprep.subr.mxu0 0.0
    %133 = vmatpush2.msra.mxu0 0.0
    %134 = vmatprep.mubr.f32.mxu0 0.0
    %135 = vmatmul.mubr.f32.gmra.mxu0 %v65
    %v136 = vpop.f32.mrf.mxu0
    %v137 = vadd.f32 %v61, %v136
    %v138 = vpop.f32.mrf.mxu0
    %139 = vmatprep.mubr.f32.mxu0 0.0
    %140 = vmatmul.mubr.f32.gmra.mxu0 %v68
    %v141 = vpop.f32.mrf.mxu0
    %v142 = vadd.f32 %v61, %v141
    %v143 = vpop.f32.mrf.mxu0
    %144 = vdwg.mxu0
    %v145 = vmax.f32 %v137, 0.0
    %v146 = vmax.f32 %v142, 0.0
    %v147 = vld [vmem:[%s3] sm:$0x1]
    %s148 = sld [smem:[#allocation2]]
    %v149 = vstv %s148
    %v151 = vsel %vm63, %v147, 0
    %v154 = vsel %vm63, %v145, 0
    %v157 = vsel %vm63, %v146, 0
    %159 = vmatprep.subr.mxu0 0.0
    %160 = vmatpush1.xpose.msra.mxu0 0.0
    %161 = vmatprep.subr.mxu0 0.0
    %162 = vmatpush1.xpose.msra.mxu0 0.0
    %163 = vmatprep.subr.mxu0 0.0
    %164 = vmatpush1.xpose.msra.mxu0 0.0
    %165 = vmatprep.subr.mxu0 0.0
    %166 = vmatpush1.xpose.msra.mxu0 0.0
    %167 = vmatprep.subr.mxu0 0.0
    %168 = vmatpush1.xpose.msra.mxu0 0.0
    %169 = vmatprep.subr.mxu0 0.0
    %170 = vmatpush1.xpose.msra.mxu0 0.0
    %171 = vmatprep.subr.mxu0 0.0
    %172 = vmatpush1.xpose.msra.mxu0 0.0
    %173 = vmatprep.subr.mxu0 0.0
    %174 = vmatpush1.xpose.msra.mxu0 0.0
    %175 = vmatprep.subr.mxu0 0.0
    %176 = vmatpush1.xpose.msra.mxu0 0.0
    %177 = vmatprep.subr.mxu0 0.0
    %178 = vmatpush1.xpose.msra.mxu0 0.0
    %179 = vmatprep.subr.mxu0 0.0
    %180 = vmatpush1.xpose.msra.mxu0 0.0
    %181 = vmatprep.subr.mxu0 0.0
    %182 = vmatpush1.xpose.msra.mxu0 0.0
    %183 = vmatprep.subr.mxu0 0.0
    %184 = vmatpush1.xpose.msra.mxu0 0.0
    %185 = vmatprep.subr.mxu0 0.0
    %186 = vmatpush1.xpose.msra.mxu0 0.0
    %187 = vmatprep.subr.mxu0 0.0
    %188 = vmatpush1.xpose.msra.mxu0 %v157
    %189 = vmatprep.subr.mxu0 0.0
    %190 = vmatpush1.xpose.msra.mxu0 %v154
    %191 = vmatprep.subr.mxu0 0.0
    %192 = vmatpush2.xpose.msra.mxu0 0.0
    %193 = vmatprep.subr.mxu0 0.0
    %194 = vmatpush2.xpose.msra.mxu0 0.0
    %195 = vmatprep.subr.mxu0 0.0
    %196 = vmatpush2.xpose.msra.mxu0 0.0
    %197 = vmatprep.subr.mxu0 0.0
    %198 = vmatpush2.xpose.msra.mxu0 0.0
    %199 = vmatprep.subr.mxu0 0.0
    %200 = vmatpush2.xpose.msra.mxu0 0.0
    %201 = vmatprep.subr.mxu0 0.0
    %202 = vmatpush2.xpose.msra.mxu0 0.0
    %203 = vmatprep.subr.mxu0 0.0
    %204 = vmatpush2.xpose.msra.mxu0 0.0
    %205 = vmatprep.subr.mxu0 0.0
    %206 = vmatpush2.xpose.msra.mxu0 0.0
    %207 = vmatprep.subr.mxu0 0.0
    %208 = vmatpush2.xpose.msra.mxu0 0.0
    %209 = vmatprep.subr.mxu0 0.0
    %210 = vmatpush2.xpose.msra.mxu0 0.0
    %211 = vmatprep.subr.mxu0 0.0
    %212 = vmatpush2.xpose.msra.mxu0 0.0
    %213 = vmatprep.subr.mxu0 0.0
    %214 = vmatpush2.xpose.msra.mxu0 0.0
    %215 = vmatprep.subr.mxu0 0.0
    %216 = vmatpush2.xpose.msra.mxu0 0.0
    %217 = vmatprep.subr.mxu0 0.0
    %218 = vmatpush2.xpose.msra.mxu0 0.0
    %219 = vmatprep.subr.mxu0 0.0
    %220 = vmatpush2.xpose.msra.mxu0 0.0
    %221 = vmatprep.subr.mxu0 0.0
    %222 = vmatpush2.xpose.msra.mxu0 0.0
    %223 = vmatprep.mubr.f32.mxu0 0.0
    %224 = vmatmul.mubr.f32.gmra.mxu0 %v151
    %v225 = vpop.f32.mrf.mxu0
    %v226 = vadd.f32 %v149, %v225
    %v227 = vpop.f32.mrf.mxu0
    %228 = vdwg.mxu0
    %v229 = vmax.f32 %v226, 0.0
    %v230 = vmul.f32 %v229, 0.5
    %v231 = vmul.f32 %v230, %v229
    %v232 = vmin.f32 %v231, 0.5
    %v233 = vadd.f32 %v226, -0.5
    %v234 = vmax.f32 %v232, %v233
    %v235 = vmul.f32 %v50, %v50
    %v236 = vmul.f32 %v51, %v51
    %v238 = vsel %vm63, 0.01, 0
    %v241 = vsel %vm63, %v235, 0
    %v244 = vsel %vm63, %v236, 0
    %246 = vmatprep.subr.mxu0 0.0
    %247 = vmatpush1.xpose.msra.mxu0 0.0
    %248 = vmatprep.subr.mxu0 0.0
    %249 = vmatpush1.xpose.msra.mxu0 0.0
    %250 = vmatprep.subr.mxu0 0.0
    %251 = vmatpush1.xpose.msra.mxu0 0.0
    %252 = vmatprep.subr.mxu0 0.0
    %253 = vmatpush1.xpose.msra.mxu0 0.0
    %254 = vmatprep.subr.mxu0 0.0
    %255 = vmatpush1.xpose.msra.mxu0 0.0
    %256 = vmatprep.subr.mxu0 0.0
    %257 = vmatpush1.xpose.msra.mxu0 0.0
    %258 = vmatprep.subr.mxu0 0.0
    %259 = vmatpush1.xpose.msra.mxu0 0.0
    %260 = vmatprep.subr.mxu0 0.0
    %261 = vmatpush1.xpose.msra.mxu0 0.0
    %262 = vmatprep.subr.mxu0 0.0
    %263 = vmatpush1.xpose.msra.mxu0 0.0
    %264 = vmatprep.subr.mxu0 0.0
    %265 = vmatpush1.xpose.msra.mxu0 0.0
    %266 = vmatprep.subr.mxu0 0.0
    %267 = vmatpush1.xpose.msra.mxu0 0.0
    %268 = vmatprep.subr.mxu0 0.0
    %269 = vmatpush1.xpose.msra.mxu0 0.0
    %270 = vmatprep.subr.mxu0 0.0
    %271 = vmatpush1.xpose.msra.mxu0 0.0
    %272 = vmatprep.subr.mxu0 0.0
    %273 = vmatpush1.xpose.msra.mxu0 0.0
    %274 = vmatprep.subr.mxu0 0.0
    %275 = vmatpush1.xpose.msra.mxu0 %v244
    %276 = vmatprep.subr.mxu0 0.0
    %277 = vmatpush1.xpose.msra.mxu0 %v241
    %278 = vmatprep.subr.mxu0 0.0
    %279 = vmatpush2.xpose.msra.mxu0 0.0
    %280 = vmatprep.subr.mxu0 0.0
    %281 = vmatpush2.xpose.msra.mxu0 0.0
    %282 = vmatprep.subr.mxu0 0.0
    %283 = vmatpush2.xpose.msra.mxu0 0.0
    %284 = vmatprep.subr.mxu0 0.0
    %285 = vmatpush2.xpose.msra.mxu0 0.0
    %286 = vmatprep.subr.mxu0 0.0
    %287 = vmatpush2.xpose.msra.mxu0 0.0
    %288 = vmatprep.subr.mxu0 0.0
    %289 = vmatpush2.xpose.msra.mxu0 0.0
    %290 = vmatprep.subr.mxu0 0.0
    %291 = vmatpush2.xpose.msra.mxu0 0.0
    %292 = vmatprep.subr.mxu0 0.0
    %293 = vmatpush2.xpose.msra.mxu0 0.0
    %294 = vmatprep.subr.mxu0 0.0
    %295 = vmatpush2.xpose.msra.mxu0 0.0
    %296 = vmatprep.subr.mxu0 0.0
    %297 = vmatpush2.xpose.msra.mxu0 0.0
    %298 = vmatprep.subr.mxu0 0.0
    %299 = vmatpush2.xpose.msra.mxu0 0.0
    %300 = vmatprep.subr.mxu0 0.0
    %301 = vmatpush2.xpose.msra.mxu0 0.0
    %302 = vmatprep.subr.mxu0 0.0
    %303 = vmatpush2.xpose.msra.mxu0 0.0
    %304 = vmatprep.subr.mxu0 0.0
    %305 = vmatpush2.xpose.msra.mxu0 0.0
    %306 = vmatprep.subr.mxu0 0.0
    %307 = vmatpush2.xpose.msra.mxu0 0.0
    %308 = vmatprep.subr.mxu0 0.0
    %309 = vmatpush2.xpose.msra.mxu0 0.0
    %310 = vmatprep.mubr.f32.mxu0 0.0
    %311 = vmatmul.mubr.f32.gmra.mxu0 %v238
    %v312 = vpop.f32.mrf.mxu0
    %v313 = vadd.f32 0.0, %v312
    %v314 = vpop.f32.mrf.mxu0
    %315 = vdwg.mxu0
    %v316 = vadd.f32 %v234, %v313
    %vm317 = vcmask 122880
    %318 = vst.msk [vmem:[#allocation8] sm:$0x1] %vm317, %v316
    // Predicated region
    $region30: #{tpu_custom_call.1} parent=1 // pred_check
      _
    $region31: #{tpu_custom_call.1} parent=1 // pred_check_branch
      %320 = sbr.rel (0) target = $region33
    $region32: #{tpu_custom_call.1} parent=1 // pred_region
      %s322 = ssub.s32 16, 16
      %323 = vsyncadd [#allocation5], %s322
      %s325 = sshll.u32 [#allocation8], 4
      %s326 = int_to_ptr.vmem [resolvable:$true] %s325
      %328 = dma.vmem_to_hbm [thread:$0]  %s326, 16, %s5, [#allocation5]
    $region33: #{tpu_custom_call.1} parent=1 // pred_fallthru
      _
    // Predicated region
    $region34: #{tpu_custom_call.1} parent=1 // pred_check
      _
    $region35: #{tpu_custom_call.1} parent=1 // pred_check_branch
      %330 = sbr.rel (0) target = $region37
    $region36: #{tpu_custom_call.1} parent=1 // pred_region
      %331 = dma.done [#allocation5], 16
    $region37: #{tpu_custom_call.1} parent=1 // pred_fallthru
      _
    %332 = vsyncpa [#allocation4], 1
    %333 = vsyncpa [#allocation7], 1
    %334 = vsyncpa [#allocation5], 1

</llo_original>
